<compile_context>
chip_gen: v6e
topology: v6e:2x2x1
jax: 0.10.0
libtpu: 0.0.40
codegen_flags: <defaults>
</compile_context>

<pallas_src>
import jax
import jax.numpy as jnp
from jax.experimental import pallas as pl
from jax.experimental.pallas import tpu as pltpu

LANE = 128


def _round_up(n, m):
    return ((n + m - 1) // m) * m


def _critic_kernel(s_ref, a_ref, w1s_ref, w1a_ref, b1_ref, w2_ref, b2_ref,
                   w3_ref, b3_ref, q_ref):
    f32 = jnp.float32

    # Layer 1: split matmul (state / action halves of W1), f32 accumulate, ReLU.
    h1 = jnp.dot(s_ref[...], w1s_ref[...], preferred_element_type=f32)
    h1 = h1 + jnp.dot(a_ref[...], w1a_ref[...], preferred_element_type=f32)
    h1 = jnp.maximum(h1 + b1_ref[...].astype(f32), 0.0)

    # Layer 2: Linear + ReLU (lane-dense 512 -> 384), bf16 MXU, f32 accumulate.
    h2 = jnp.dot(h1.astype(w2_ref.dtype), w2_ref[...], preferred_element_type=f32)
    h2 = jnp.maximum(h2 + b2_ref[...].astype(f32), 0.0)

    # Layer 3: single output unit -> VPU multiply + XLU lane-reduce.
    # Writes only 4 B/row to HBM instead of a padded (TB, 128) f32 slab; the
    # XLU slot is otherwise idle in this kernel, so the reduce is ~free.
    q = jnp.sum(h2 * w3_ref[...].astype(f32), axis=-1, keepdims=True)
    q_ref[...] = (q + b3_ref[...].astype(f32)).astype(q_ref.dtype)


def pack_critic_params(params, state_dim, action_dim, dtype=jnp.bfloat16):
    """Zero-pad logical (PyTorch-layout) params to lane-aligned kernel params.

    Padded rows/cols are exactly zero, so ReLU/matmul results match the
    unpadded network. bf16 (default) is MXU-native on v5e/v6e/v7x and halves
    resident-weight DMA; accumulation stays f32 inside the kernel.
    """
    w1, b1, w2, b2, w3, b3 = params      # w1:[F_in,H1] b1:[H1] w2:[H1,H2] w3:[H2,1]
    F_in, H1 = w1.shape
    H2 = w2.shape[1]
    assert F_in == state_dim + action_dim
    H1p = _round_up(H1, LANE)            # 400 -> 512
    H2p = _round_up(H2, LANE)            # 300 -> 384

    w1p = jnp.zeros((F_in, H1p), dtype).at[:, :H1].set(w1.astype(dtype))
    w1s = w1p[:state_dim]                # [state_dim, H1p]
    w1a = w1p[state_dim:]                # [action_dim, H1p]
    b1p = jnp.zeros((1, H1p), dtype).at[0, :H1].set(b1.astype(dtype))
    w2p = jnp.zeros((H1p, H2p), dtype).at[:H1, :H2].set(w2.astype(dtype))
    b2p = jnp.zeros((1, H2p), dtype).at[0, :H2].set(b2.astype(dtype))
    # Layer-3 weight stored as a single lane-dense row [1, H2p].
    w3p = jnp.zeros((1, H2p), dtype).at[0, :H2].set(w3[:, 0].astype(dtype))
    b3p = jnp.zeros((1, 1), jnp.float32).at[0, 0].set(b3[0].astype(jnp.float32))
    return (w1s, w1a, b1p, w2p, b2p, w3p, b3p)


def critic_forward(state, action, packed_params, *, block_b=512):
    """Full Critic MLP in one pallas_call, batch-tiled over a parallel grid."""
    w1s, w1a, b1, w2, b2, w3, b3 = packed_params
    dtype = w1s.dtype
    state = state.astype(dtype)
    action = action.astype(dtype)

    B, Ds = state.shape
    Da = action.shape[1]

    # Batch tile: multiple of 16 (bf16 sublane packing). When B > 16 we cap
    # the tile at ceil(B/2) so there are >=2 grid steps -> both v7x TCs get
    # work via dimension_semantics=("parallel",); harmless on v5e/v6e.
    block_b = _round_up(block_b, 16)
    if B > 16:
        TB = min(block_b, _round_up(pl.cdiv(B, 2), 16))
    else:
        TB = B                            # block == full batch dim (small B)
    grid = (pl.cdiv(B, TB),)

    # Weights/biases stay resident in VMEM across all batch tiles.
    resident = lambda shape: pl.BlockSpec(shape, lambda i: (0, 0))

    q = pl.pallas_call(
        _critic_kernel,
        out_shape=jax.ShapeDtypeStruct((B, 1), jnp.float32),
        grid=grid,
        in_specs=[
            pl.BlockSpec((TB, Ds), lambda i: (i, 0)),   # state  (batch-tiled)
            pl.BlockSpec((TB, Da), lambda i: (i, 0)),   # action (batch-tiled)
            resident(w1s.shape), resident(w1a.shape), resident(b1.shape),
            resident(w2.shape), resident(b2.shape),
            resident(w3.shape), resident(b3.shape),
        ],
        out_specs=pl.BlockSpec((TB, 1), lambda i: (i, 0)),
        compiler_params=pltpu.CompilerParams(
            dimension_semantics=("parallel",),          # megacore on v7x
            vmem_limit_bytes=32 << 20,                  # headroom at TB=512; safe on 64 MiB v7x
        ),
    )(state, action, w1s, w1a, b1, w2, b2, w3, b3)
    return q


def init_critic_params(key, state_dim, action_dim, hidden_sizes=(400, 300)):
    """PyTorch nn.Linear default init: U(-1/sqrt(fan_in), 1/sqrt(fan_in)).
    Weights stored as [in, out] (transposed vs torch's [out, in])."""
    dims = [state_dim + action_dim, hidden_sizes[0], hidden_sizes[1], 1]
    params = []
    for i in range(3):
        fan_in, fan_out = dims[i], dims[i + 1]
        key, kw, kb = jax.random.split(key, 3)
        bound = float(fan_in) ** -0.5
        w = jax.random.uniform(kw, (fan_in, fan_out), jnp.float32, -bound, bound)
        b = jax.random.uniform(kb, (fan_out,), jnp.float32, -bound, bound)
        params += [w, b]
    return tuple(params)


def critic_reference(state, action, params):
    """Pure-JAX f32 reference on the unpadded (logical) parameters."""
    w1, b1, w2, b2, w3, b3 = params
    x = jnp.concatenate([state, action], axis=1)
    h1 = jnp.maximum(x @ w1 + b1, 0.0)
    h2 = jnp.maximum(h1 @ w2 + b2, 0.0)
    return h2 @ w3 + b3


if __name__ == "__main__":
    batch, state_dim, action_dim = 4, 16, 8
    hidden_sizes = (400, 300)   # module defaults

    key = jax.random.PRNGKey(0)
    k_params, k_state, k_action = jax.random.split(key, 3)

    params = init_critic_params(k_params, state_dim, action_dim, hidden_sizes)
    packed = pack_critic_params(params, state_dim, action_dim, dtype=jnp.bfloat16)

    state = jax.random.normal(k_state, (batch, state_dim), jnp.float32)
    action = jax.random.normal(k_action, (batch, action_dim), jnp.float32)

    q = critic_forward(state, action, packed)
    q = jax.block_until_ready(q)

    q_ref = critic_reference(state, action, params)
    assert q.shape == (batch, 1), q.shape
    # bf16 weights/activations (f32 accumulation) -> ~1e-2 relative agreement.
    assert jnp.allclose(q, q_ref, atol=2e-2, rtol=2e-2), (q, q_ref)

    print("KERNEL_OK")
</pallas_src>

<mosaic_0001>
module attributes {stable_mosaic.version = 11 : i64} {
  func.func @_critic_kernel(%arg0: i32, %arg1: memref<4x16xbf16, #tpu.memory_space<vmem>>, %arg2: memref<4x8xbf16, #tpu.memory_space<vmem>>, %arg3: memref<16x512xbf16, #tpu.memory_space<vmem>>, %arg4: memref<8x512xbf16, #tpu.memory_space<vmem>>, %arg5: memref<1x512xbf16, #tpu.memory_space<vmem>>, %arg6: memref<512x384xbf16, #tpu.memory_space<vmem>>, %arg7: memref<1x384xbf16, #tpu.memory_space<vmem>>, %arg8: memref<1x384xbf16, #tpu.memory_space<vmem>>, %arg9: memref<1x1xf32, #tpu.memory_space<vmem>>, %arg10: memref<4x1xf32, #tpu.memory_space<vmem>>) attributes {dimension_semantics = [#tpu.dimension_semantics<parallel>], iteration_bounds = array<i64: 1>, scalar_prefetch = 0 : i64, scratch_operands = 0 : i64, tpu.core_type = #tpu.core_type<tc>, window_params = [{transform_indices = @transform_0, window_bounds = array<i64: 4, 16>}, {transform_indices = @transform_1, window_bounds = array<i64: 4, 8>}, {pipeline_mode = #tpu.pipeline_mode<synchronous>, transform_indices = @transform_2, window_bounds = array<i64: 16, 512>}, {pipeline_mode = #tpu.pipeline_mode<synchronous>, transform_indices = @transform_3, window_bounds = array<i64: 8, 512>}, {pipeline_mode = #tpu.pipeline_mode<synchronous>, transform_indices = @transform_4, window_bounds = array<i64: 1, 512>}, {pipeline_mode = #tpu.pipeline_mode<synchronous>, transform_indices = @transform_5, window_bounds = array<i64: 512, 384>}, {pipeline_mode = #tpu.pipeline_mode<synchronous>, transform_indices = @transform_6, window_bounds = array<i64: 1, 384>}, {pipeline_mode = #tpu.pipeline_mode<synchronous>, transform_indices = @transform_7, window_bounds = array<i64: 1, 384>}, {pipeline_mode = #tpu.pipeline_mode<synchronous>, transform_indices = @transform_8, window_bounds = array<i64: 1, 1>}, {transform_indices = @transform_9, window_bounds = array<i64: 4, 1>}]} {
    %c0 = arith.constant 0 : index
    %c0_0 = arith.constant 0 : index
    %0 = vector.load %arg1[%c0, %c0_0] : memref<4x16xbf16, #tpu.memory_space<vmem>>, vector<4x16xbf16>
    %c0_1 = arith.constant 0 : index
    %c0_2 = arith.constant 0 : index
    %1 = vector.load %arg3[%c0_1, %c0_2] : memref<16x512xbf16, #tpu.memory_space<vmem>>, vector<16x512xbf16>
    %cst = arith.constant dense<0.000000e+00> : vector<4x512xf32>
    %2 = tpu.matmul %0, %1, %cst {dimension_numbers = #tpu.dot_dimension_numbers<[1], [0], [0], [1], [0, 0, 1, 1], [], []>} : vector<4x16xbf16>, vector<16x512xbf16>, vector<4x512xf32> -> vector<4x512xf32>
    %c0_3 = arith.constant 0 : index
    %c0_4 = arith.constant 0 : index
    %3 = vector.load %arg2[%c0_3, %c0_4] : memref<4x8xbf16, #tpu.memory_space<vmem>>, vector<4x8xbf16>
    %c0_5 = arith.constant 0 : index
    %c0_6 = arith.constant 0 : index
    %4 = vector.load %arg4[%c0_5, %c0_6] : memref<8x512xbf16, #tpu.memory_space<vmem>>, vector<8x512xbf16>
    %cst_7 = arith.constant dense<0.000000e+00> : vector<4x512xf32>
    %5 = tpu.matmul %3, %4, %cst_7 {dimension_numbers = #tpu.dot_dimension_numbers<[1], [0], [0], [1], [0, 0, 1, 1], [], []>} : vector<4x8xbf16>, vector<8x512xbf16>, vector<4x512xf32> -> vector<4x512xf32>
    %6 = arith.addf %2, %5 : vector<4x512xf32>
    %c0_8 = arith.constant 0 : index
    %c0_9 = arith.constant 0 : index
    %7 = vector.load %arg5[%c0_8, %c0_9] : memref<1x512xbf16, #tpu.memory_space<vmem>>, vector<1x512xbf16>
    %8 = arith.extf %7 : vector<1x512xbf16> to vector<1x512xf32>
    %9 = vector.broadcast %8 : vector<1x512xf32> to vector<4x512xf32>
    %10 = arith.addf %6, %9 : vector<4x512xf32>
    %cst_10 = arith.constant 0.000000e+00 : f32
    %11 = vector.broadcast %cst_10 : f32 to vector<4x512xf32>
    %12 = arith.maximumf %10, %11 : vector<4x512xf32>
    %13 = arith.truncf %12 : vector<4x512xf32> to vector<4x512xbf16>
    %c0_11 = arith.constant 0 : index
    %c0_12 = arith.constant 0 : index
    %14 = vector.load %arg6[%c0_11, %c0_12] : memref<512x384xbf16, #tpu.memory_space<vmem>>, vector<512x384xbf16>
    %cst_13 = arith.constant dense<0.000000e+00> : vector<4x384xf32>
    %15 = tpu.matmul %13, %14, %cst_13 {dimension_numbers = #tpu.dot_dimension_numbers<[1], [0], [0], [1], [0, 0, 1, 1], [], []>} : vector<4x512xbf16>, vector<512x384xbf16>, vector<4x384xf32> -> vector<4x384xf32>
    %c0_14 = arith.constant 0 : index
    %c0_15 = arith.constant 0 : index
    %16 = vector.load %arg7[%c0_14, %c0_15] : memref<1x384xbf16, #tpu.memory_space<vmem>>, vector<1x384xbf16>
    %17 = arith.extf %16 : vector<1x384xbf16> to vector<1x384xf32>
    %18 = vector.broadcast %17 : vector<1x384xf32> to vector<4x384xf32>
    %19 = arith.addf %15, %18 : vector<4x384xf32>
    %cst_16 = arith.constant 0.000000e+00 : f32
    %20 = vector.broadcast %cst_16 : f32 to vector<4x384xf32>
    %21 = arith.maximumf %19, %20 : vector<4x384xf32>
    %c0_17 = arith.constant 0 : index
    %c0_18 = arith.constant 0 : index
    %22 = vector.load %arg8[%c0_17, %c0_18] : memref<1x384xbf16, #tpu.memory_space<vmem>>, vector<1x384xbf16>
    %23 = arith.extf %22 : vector<1x384xbf16> to vector<1x384xf32>
    %24 = vector.broadcast %23 : vector<1x384xf32> to vector<4x384xf32>
    %25 = arith.mulf %21, %24 : vector<4x384xf32>
    %cst_19 = arith.constant dense<0.000000e+00> : vector<4xf32>
    %26 = vector.multi_reduction <add>, %25, %cst_19 [1] : vector<4x384xf32> to vector<4xf32>
    %27 = vector.shape_cast %26 : vector<4xf32> to vector<4x1xf32>
    %c0_20 = arith.constant 0 : index
    %c0_21 = arith.constant 0 : index
    %28 = vector.load %arg9[%c0_20, %c0_21] : memref<1x1xf32, #tpu.memory_space<vmem>>, vector<1x1xf32>
    %29 = vector.broadcast %28 : vector<1x1xf32> to vector<4x1xf32>
    %30 = arith.addf %27, %29 : vector<4x1xf32>
    %c0_22 = arith.constant 0 : index
    %c0_23 = arith.constant 0 : index
    %31 = vector.load %arg10[%c0_22, %c0_23] : memref<4x1xf32, #tpu.memory_space<vmem>>, vector<4x1xf32>
    tpu.vector_store %arg10[%c0_22, %c0_23], %30 {strides = array<i32>} : memref<4x1xf32, #tpu.memory_space<vmem>>, vector<4x1xf32>,
    return
  }
  func.func @transform_0(%arg0: i32) -> (i32, i32) {
    %c0_i32 = arith.constant 0 : i32
    %c0_i32_0 = arith.constant 0 : i32
    return %arg0, %c0_i32 : i32, i32
  }
  func.func @transform_1(%arg0: i32) -> (i32, i32) {
    %c0_i32 = arith.constant 0 : i32
    %c0_i32_0 = arith.constant 0 : i32
    return %arg0, %c0_i32 : i32, i32
  }
  func.func @transform_2(%arg0: i32) -> (i32, i32) {
    %c0_i32 = arith.constant 0 : i32
    %c0_i32_0 = arith.constant 0 : i32
    %c0_i32_1 = arith.constant 0 : i32
    return %c0_i32, %c0_i32_0 : i32, i32
  }
  func.func @transform_3(%arg0: i32) -> (i32, i32) {
    %c0_i32 = arith.constant 0 : i32
    %c0_i32_0 = arith.constant 0 : i32
    %c0_i32_1 = arith.constant 0 : i32
    return %c0_i32, %c0_i32_0 : i32, i32
  }
  func.func @transform_4(%arg0: i32) -> (i32, i32) {
    %c0_i32 = arith.constant 0 : i32
    %c0_i32_0 = arith.constant 0 : i32
    %c0_i32_1 = arith.constant 0 : i32
    return %c0_i32, %c0_i32_0 : i32, i32
  }
  func.func @transform_5(%arg0: i32) -> (i32, i32) {
    %c0_i32 = arith.constant 0 : i32
    %c0_i32_0 = arith.constant 0 : i32
    %c0_i32_1 = arith.constant 0 : i32
    return %c0_i32, %c0_i32_0 : i32, i32
  }
  func.func @transform_6(%arg0: i32) -> (i32, i32) {
    %c0_i32 = arith.constant 0 : i32
    %c0_i32_0 = arith.constant 0 : i32
    %c0_i32_1 = arith.constant 0 : i32
    return %c0_i32, %c0_i32_0 : i32, i32
  }
  func.func @transform_7(%arg0: i32) -> (i32, i32) {
    %c0_i32 = arith.constant 0 : i32
    %c0_i32_0 = arith.constant 0 : i32
    %c0_i32_1 = arith.constant 0 : i32
    return %c0_i32, %c0_i32_0 : i32, i32
  }
  func.func @transform_8(%arg0: i32) -> (i32, i32) {
    %c0_i32 = arith.constant 0 : i32
    %c0_i32_0 = arith.constant 0 : i32
    %c0_i32_1 = arith.constant 0 : i32
    return %c0_i32, %c0_i32_0 : i32, i32
  }
  func.func @transform_9(%arg0: i32) -> (i32, i32) {
    %c0_i32 = arith.constant 0 : i32
    %c0_i32_0 = arith.constant 0 : i32
    return %arg0, %c0_i32 : i32, i32
  }
}

</mosaic_0001>

<llo_original>
// kernel: tpu_custom_call.1
$region0: #{tpu_custom_call.1}
  #allocation0 [shape = 'u32[]', space=smem, size = 0x4, offset = 0x4, fixed_abs, tag = 'smem constant byte address 0x4 - core index']
  #allocation1 [shape = 'u32[144,128]{1,0:T(1,128)}', space=vmem, size = 0x12000, scoped, tag = 'internal scratch']
  #allocation2 [shape = 'f32[1,1]{1,0:T(1,128)S(1)}', space=vmem, size = 0x200, scoped, tag = 'scoped memory for tpu_custom_call.1']
  %s0 = inlined_call_operand.hbm [shape: bf16[4,16], index: 0, kind: input, shape index: {}]
  %s1 = inlined_call_operand.hbm [shape: bf16[4,8], index: 1, kind: input, shape index: {}]
  %s2 = inlined_call_operand.hbm [shape: bf16[16,512], index: 2, kind: input, shape index: {}]
  %s3 = inlined_call_operand.hbm [shape: bf16[8,512], index: 3, kind: input, shape index: {}]
  %s4 = inlined_call_operand.vmem [shape: bf16[1,512], index: 4, kind: input, shape index: {}]
  %s5 = inlined_call_operand.hbm [shape: bf16[512,384], index: 5, kind: input, shape index: {}]
  %s6 = inlined_call_operand.vmem [shape: bf16[1,384], index: 6, kind: input, shape index: {}]
  %s7 = inlined_call_operand.vmem [shape: bf16[1,384], index: 7, kind: input, shape index: {}]
  %s8 = inlined_call_operand.<no memory space> [shape: f32[1,1], index: 8, kind: input, shape index: {}]
  %s9 = inlined_call_operand.vmem [shape: f32[4,1], index: 9, kind: output, shape index: {}]
  %s10 = sld [smem:[#allocation0]]
  $region66: #{tpu_custom_call.1} parent=0
    _
  %s12 = ssub.s32 1, %s10
  %s13 = scalar_select 0, %s12, %s10
  %v14 = vstv %s8
  %15 = vst [vmem:[#allocation2] sm:$0x1] %v14
  $region1: #{tpu_custom_call.1} parent=0
    #allocation3 [shape = 'u8[1024]{0}', space=vmem, size = 0x400, scoped, tag = 'input window, operand 0, single buffered']
    #allocation4 [shape = 's32[1]{0}', space=sflag, size = 0x4, scoped, tag = 'scoped memory for tpu_custom_call.1']
    #allocation5 [shape = 'u8[1024]{0}', space=vmem, size = 0x400, scoped, tag = 'input window, operand 1, single buffered']
    #allocation6 [shape = 's32[1]{0}', space=sflag, size = 0x4, scoped, tag = 'scoped memory for tpu_custom_call.1']
    #allocation7 [shape = 'u8[16384]{0}', space=vmem, size = 0x4000, scoped, tag = 'input window, operand 2, single buffered']
    #allocation8 [shape = 'u8[8192]{0}', space=vmem, size = 0x2000, scoped, tag = 'input window, operand 3, single buffered']
    #allocation9 [shape = 's32[1]{0}', space=sflag, size = 0x4, scoped, tag = 'scoped memory for tpu_custom_call.1']
    #allocation10 [shape = 'u8[393216]{0}', space=vmem, size = 0x60000, scoped, tag = 'input window, operand 5, single buffered']
    %16 = vsyncpa [#allocation4], 0
    %17 = vsyncpa [#allocation6], 0
    %18 = vsyncpa [#allocation9], 0
    // Predicated region
    $region2: #{tpu_custom_call.1} parent=1 // pred_check
      _
    $region3: #{tpu_custom_call.1} parent=1 // pred_check_branch
      %20 = sbr.rel (0) target = $region5
    $region4: #{tpu_custom_call.1} parent=1 // pred_region
      %s22 = ssub.s32 32, 32
      %23 = vsyncadd [#allocation4], %s22
      %s25 = sshll.u32 [#allocation3], 4
      %s26 = int_to_ptr.vmem [resolvable:$true] %s25
      %28 = dma.hbm_to_vmem [thread:$0]  %s0, 32, %s26, [#allocation4]
    $region5: #{tpu_custom_call.1} parent=1 // pred_fallthru
      _
    // Predicated region
    $region6: #{tpu_custom_call.1} parent=1 // pred_check
      _
    $region7: #{tpu_custom_call.1} parent=1 // pred_check_branch
      %30 = sbr.rel (0) target = $region9
    $region8: #{tpu_custom_call.1} parent=1 // pred_region
      %s32 = ssub.s32 32, 32
      %33 = vsyncadd [#allocation6], %s32
      %s35 = sshll.u32 [#allocation5], 4
      %s36 = int_to_ptr.vmem [resolvable:$true] %s35
      %38 = dma.hbm_to_vmem [thread:$0]  %s1, 32, %s36, [#allocation6]
    $region9: #{tpu_custom_call.1} parent=1 // pred_fallthru
      _
    // Predicated region
    $region10: #{tpu_custom_call.1} parent=1 // pred_check
      _
    $region11: #{tpu_custom_call.1} parent=1 // pred_check_branch
      %40 = sbr.rel (0) target = $region13
    $region12: #{tpu_custom_call.1} parent=1 // pred_region
      %s42 = ssub.s32 512, 512
      %43 = vsyncadd [#allocation6], %s42
      %s44 = sshll.u32 [#allocation7], 4
      %s45 = int_to_ptr.vmem [resolvable:$true] %s44
      %50 = dma.hbm_to_vmem [thread:$0]  %s2, 512, %s45, [#allocation6], 256, 256, 16
    $region13: #{tpu_custom_call.1} parent=1 // pred_fallthru
      _
    // Predicated region
    $region14: #{tpu_custom_call.1} parent=1 // pred_check
      _
    $region15: #{tpu_custom_call.1} parent=1 // pred_check_branch
      %52 = sbr.rel (0) target = $region17
    $region16: #{tpu_custom_call.1} parent=1 // pred_region
      %s54 = ssub.s32 256, 256
      %55 = vsyncadd [#allocation9], %s54
      %s57 = sshll.u32 [#allocation8], 4
      %s58 = int_to_ptr.vmem [resolvable:$true] %s57
      %60 = dma.hbm_to_vmem [thread:$0]  %s3, 256, %s58, [#allocation9]
    $region17: #{tpu_custom_call.1} parent=1 // pred_fallthru
      _
    // Predicated region
    $region18: #{tpu_custom_call.1} parent=1 // pred_check
      _
    $region19: #{tpu_custom_call.1} parent=1 // pred_check_branch
      %62 = sbr.rel (0) target = $region21
    $region20: #{tpu_custom_call.1} parent=1 // pred_region
      _
    $region21: #{tpu_custom_call.1} parent=1 // pred_fallthru
      _
    // Predicated region
    $region22: #{tpu_custom_call.1} parent=1 // pred_check
      _
    $region23: #{tpu_custom_call.1} parent=1 // pred_check_branch
      %64 = sbr.rel (0) target = $region25
    $region24: #{tpu_custom_call.1} parent=1 // pred_region
      %s66 = ssub.s32 12288, 12288
      %67 = vsyncadd [#allocation9], %s66
      %s68 = sshll.u32 [#allocation10], 4
      %s69 = int_to_ptr.vmem [resolvable:$true] %s68
      %74 = dma.hbm_to_vmem [thread:$0]  %s5, 12288, %s69, [#allocation9], 192, 192, 12
    $region25: #{tpu_custom_call.1} parent=1 // pred_fallthru
      _
    // Predicated region
    $region26: #{tpu_custom_call.1} parent=1 // pred_check
      _
    $region27: #{tpu_custom_call.1} parent=1 // pred_check_branch
      %76 = sbr.rel (0) target = $region29
    $region28: #{tpu_custom_call.1} parent=1 // pred_region
      _
    $region29: #{tpu_custom_call.1} parent=1 // pred_fallthru
      _
    // Predicated region
    $region30: #{tpu_custom_call.1} parent=1 // pred_check
      _
    $region31: #{tpu_custom_call.1} parent=1 // pred_check_branch
      %78 = sbr.rel (0) target = $region33
    $region32: #{tpu_custom_call.1} parent=1 // pred_region
      _
    $region33: #{tpu_custom_call.1} parent=1 // pred_fallthru
      _
    // Predicated region
    $region34: #{tpu_custom_call.1} parent=1 // pred_check
      _
    $region35: #{tpu_custom_call.1} parent=1 // pred_check_branch
      %80 = sbr.rel (0) target = $region37
    $region36: #{tpu_custom_call.1} parent=1 // pred_region
      _
    $region37: #{tpu_custom_call.1} parent=1 // pred_fallthru
      _
    // Predicated region
    $region38: #{tpu_custom_call.1} parent=1 // pred_check
      _
    $region39: #{tpu_custom_call.1} parent=1 // pred_check_branch
      %82 = sbr.rel (0) target = $region41
    $region40: #{tpu_custom_call.1} parent=1 // pred_region
      %83 = dma.done [#allocation4], 32
    $region41: #{tpu_custom_call.1} parent=1 // pred_fallthru
      _
    // Predicated region
    $region42: #{tpu_custom_call.1} parent=1 // pred_check
      _
    $region43: #{tpu_custom_call.1} parent=1 // pred_check_branch
      %85 = sbr.rel (0) target = $region45
    $region44: #{tpu_custom_call.1} parent=1 // pred_region
      %86 = dma.done [#allocation6], 32
    $region45: #{tpu_custom_call.1} parent=1 // pred_fallthru
      _
    // Predicated region
    $region46: #{tpu_custom_call.1} parent=1 // pred_check
      _
    $region47: #{tpu_custom_call.1} parent=1 // pred_check_branch
      %88 = sbr.rel (0) target = $region49
    $region48: #{tpu_custom_call.1} parent=1 // pred_region
      %89 = dma.done [#allocation6], 512
    $region49: #{tpu_custom_call.1} parent=1 // pred_fallthru
      _
    // Predicated region
    $region50: #{tpu_custom_call.1} parent=1 // pred_check
      _
    $region51: #{tpu_custom_call.1} parent=1 // pred_check_branch
      %91 = sbr.rel (0) target = $region53
    $region52: #{tpu_custom_call.1} parent=1 // pred_region
      %92 = dma.done [#allocation9], 256
    $region53: #{tpu_custom_call.1} parent=1 // pred_fallthru
      _
    // Predicated region
    $region54: #{tpu_custom_call.1} parent=1 // pred_check
      _
    $region55: #{tpu_custom_call.1} parent=1 // pred_check_branch
      %94 = sbr.rel (0) target = $region57
    $region56: #{tpu_custom_call.1} parent=1 // pred_region
      %95 = dma.done [#allocation9], 12288
    $region57: #{tpu_custom_call.1} parent=1 // pred_fallthru
      _
    %v97 = vld [vmem:[#allocation3] sm:$0x3]
    %v98 = vld [vmem:[#allocation7] sm:$0xff]
    %v99 = vld [vmem:[#allocation7 + $0x8] sm:$0xff]
    %v100 = vld [vmem:[#allocation7 + $0x10] sm:$0xff]
    %v101 = vld [vmem:[#allocation7 + $0x18] sm:$0xff]
    %v102 = vld [vmem:[#allocation5] sm:$0x3]
    %v103 = vld [vmem:[#allocation8] sm:$0xff]
    %v104 = vld [vmem:[#allocation8 + $0x8] sm:$0xff]
    %v107 = vunpack.c.l.b16 %v103
    %v108 = vunpack.c.h.b16 %v103
    %v109 = vunpack.c.l.b16 %v104
    %v110 = vunpack.c.h.b16 %v104
    %v111 = vpack.c.b16 %v107, %v107
    %v112 = vpack.c.b16 %v108, %v108
    %v113 = vpack.c.b16 %v109, %v109
    %v114 = vpack.c.b16 %v110, %v110
    %vm115 = vcmask 64512
    %v117 = vsel %vm115, %v102, 0
    %vm119 = vcmask 1043456
    %v121 = vsel %vm119, %v111, 0
    %v124 = vsel %vm119, %v112, 0
    %v127 = vsel %vm119, %v113, 0
    %v130 = vsel %vm119, %v114, 0
    %132 = vmatprep.subr.bf16.mxu0 0
    %133 = vmatpush1.bf16.msra.mxu0 0
    %134 = vmatprep.subr.bf16.mxu0 0
    %135 = vmatpush1.bf16.msra.mxu0 0
    %136 = vmatprep.subr.bf16.mxu0 0
    %137 = vmatpush1.bf16.msra.mxu0 0
    %138 = vmatprep.subr.bf16.mxu0 0
    %139 = vmatpush1.bf16.msra.mxu0 0
    %140 = vmatprep.subr.bf16.mxu0 0
    %141 = vmatpush1.bf16.msra.mxu0 0
    %142 = vmatprep.subr.bf16.mxu0 0
    %143 = vmatpush1.bf16.msra.mxu0 0
    %144 = vmatprep.subr.bf16.mxu0 0
    %145 = vmatpush1.bf16.msra.mxu0 0
    %146 = vmatprep.subr.bf16.mxu0 %v124
    %147 = vmatpush1.bf16.msra.mxu0 %v121
    %148 = vmatprep.subr.bf16.mxu0 0
    %149 = vmatpush2.bf16.msra.mxu0 0
    %150 = vmatprep.subr.bf16.mxu0 0
    %151 = vmatpush2.bf16.msra.mxu0 0
    %152 = vmatprep.subr.bf16.mxu0 0
    %153 = vmatpush2.bf16.msra.mxu0 0
    %154 = vmatprep.subr.bf16.mxu0 0
    %155 = vmatpush2.bf16.msra.mxu0 0
    %156 = vmatprep.subr.bf16.mxu0 0
    %157 = vmatpush2.bf16.msra.mxu0 0
    %158 = vmatprep.subr.bf16.mxu0 0
    %159 = vmatpush2.bf16.msra.mxu0 0
    %160 = vmatprep.subr.bf16.mxu0 0
    %161 = vmatpush2.bf16.msra.mxu0 0
    %162 = vmatprep.subr.bf16.mxu0 0
    %163 = vmatpush2.bf16.msra.mxu0 0
    %164 = vmatprep.mubr.bf16.mxu0 0
    %165 = vmatmul.mubr.bf16.gmra.mxu0 %v117
    %v166 = vpop.f32.mrf.mxu0
    %v167 = vadd.f32 0.0, %v166
    %v168 = vpop.f32.mrf.mxu0
    %v169 = vadd.f32 0.0, %v168
    %v170 = vpop.f32.mrf.mxu0
    %v171 = vpop.f32.mrf.mxu0
    %172 = vdwg.mxu0
    %173 = vmatprep.subr.bf16.mxu0 0
    %174 = vmatpush1.bf16.msra.mxu0 0
    %175 = vmatprep.subr.bf16.mxu0 0
    %176 = vmatpush1.bf16.msra.mxu0 0
    %177 = vmatprep.subr.bf16.mxu0 0
    %178 = vmatpush1.bf16.msra.mxu0 0
    %179 = vmatprep.subr.bf16.mxu0 0
    %180 = vmatpush1.bf16.msra.mxu0 0
    %181 = vmatprep.subr.bf16.mxu0 0
    %182 = vmatpush1.bf16.msra.mxu0 0
    %183 = vmatprep.subr.bf16.mxu0 0
    %184 = vmatpush1.bf16.msra.mxu0 0
    %185 = vmatprep.subr.bf16.mxu0 0
    %186 = vmatpush1.bf16.msra.mxu0 0
    %187 = vmatprep.subr.bf16.mxu0 %v130
    %188 = vmatpush1.bf16.msra.mxu0 %v127
    %189 = vmatprep.subr.bf16.mxu0 0
    %190 = vmatpush2.bf16.msra.mxu0 0
    %191 = vmatprep.subr.bf16.mxu0 0
    %192 = vmatpush2.bf16.msra.mxu0 0
    %193 = vmatprep.subr.bf16.mxu0 0
    %194 = vmatpush2.bf16.msra.mxu0 0
    %195 = vmatprep.subr.bf16.mxu0 0
    %196 = vmatpush2.bf16.msra.mxu0 0
    %197 = vmatprep.subr.bf16.mxu0 0
    %198 = vmatpush2.bf16.msra.mxu0 0
    %199 = vmatprep.subr.bf16.mxu0 0
    %200 = vmatpush2.bf16.msra.mxu0 0
    %201 = vmatprep.subr.bf16.mxu0 0
    %202 = vmatpush2.bf16.msra.mxu0 0
    %203 = vmatprep.subr.bf16.mxu0 0
    %204 = vmatpush2.bf16.msra.mxu0 0
    %205 = vmatprep.mubr.bf16.mxu0 0
    %206 = vmatmul.mubr.bf16.gmra.mxu0 %v117
    %v207 = vpop.f32.mrf.mxu0
    %v208 = vadd.f32 0.0, %v207
    %v209 = vpop.f32.mrf.mxu0
    %v210 = vadd.f32 0.0, %v209
    %v211 = vpop.f32.mrf.mxu0
    %v212 = vpop.f32.mrf.mxu0
    %213 = vdwg.mxu0
    %v218 = vunpack.c.l.b16 %v98
    %v219 = vunpack.c.h.b16 %v98
    %v220 = vunpack.c.l.b16 %v99
    %v221 = vunpack.c.h.b16 %v99
    %v222 = vunpack.c.l.b16 %v100
    %v223 = vunpack.c.h.b16 %v100
    %v224 = vunpack.c.l.b16 %v101
    %v225 = vunpack.c.h.b16 %v101
    %v226 = vpack.c.b16 %v222, %v218
    %v227 = vpack.c.b16 %v223, %v219
    %v228 = vpack.c.b16 %v224, %v220
    %v229 = vpack.c.b16 %v225, %v221
    %vm234 = vcmask 130048
    %v236 = vsel %vm234, %v97, 0
    %238 = vmatprep.subr.bf16.mxu0 0
    %239 = vmatpush1.bf16.msra.mxu0 0
    %240 = vmatprep.subr.bf16.mxu0 0
    %241 = vmatpush1.bf16.msra.mxu0 0
    %242 = vmatprep.subr.bf16.mxu0 0
    %243 = vmatpush1.bf16.msra.mxu0 0
    %244 = vmatprep.subr.bf16.mxu0 0
    %245 = vmatpush1.bf16.msra.mxu0 0
    %246 = vmatprep.subr.bf16.mxu0 0
    %247 = vmatpush1.bf16.msra.mxu0 0
    %248 = vmatprep.subr.bf16.mxu0 0
    %249 = vmatpush1.bf16.msra.mxu0 0
    %250 = vmatprep.subr.bf16.mxu0 0
    %251 = vmatpush1.bf16.msra.mxu0 0
    %252 = vmatprep.subr.bf16.mxu0 %v227
    %253 = vmatpush1.bf16.msra.mxu0 %v226
    %254 = vmatprep.subr.bf16.mxu0 0
    %255 = vmatpush2.bf16.msra.mxu0 0
    %256 = vmatprep.subr.bf16.mxu0 0
    %257 = vmatpush2.bf16.msra.mxu0 0
    %258 = vmatprep.subr.bf16.mxu0 0
    %259 = vmatpush2.bf16.msra.mxu0 0
    %260 = vmatprep.subr.bf16.mxu0 0
    %261 = vmatpush2.bf16.msra.mxu0 0
    %262 = vmatprep.subr.bf16.mxu0 0
    %263 = vmatpush2.bf16.msra.mxu0 0
    %264 = vmatprep.subr.bf16.mxu0 0
    %265 = vmatpush2.bf16.msra.mxu0 0
    %266 = vmatprep.subr.bf16.mxu0 0
    %267 = vmatpush2.bf16.msra.mxu0 0
    %268 = vmatprep.subr.bf16.mxu0 0
    %269 = vmatpush2.bf16.msra.mxu0 0
    %270 = vmatprep.mubr.bf16.mxu0 0
    %271 = vmatmul.mubr.bf16.gmra.mxu0 %v236
    %v272 = vpop.f32.mrf.mxu0
    %v273 = vadd.f32 %v167, %v272
    %v274 = vpop.f32.mrf.mxu0
    %v275 = vadd.f32 %v169, %v274
    %v276 = vpop.f32.mrf.mxu0
    %v277 = vpop.f32.mrf.mxu0
    %278 = vdwg.mxu0
    %279 = vmatprep.subr.bf16.mxu0 0
    %280 = vmatpush1.bf16.msra.mxu0 0
    %281 = vmatprep.subr.bf16.mxu0 0
    %282 = vmatpush1.bf16.msra.mxu0 0
    %283 = vmatprep.subr.bf16.mxu0 0
    %284 = vmatpush1.bf16.msra.mxu0 0
    %285 = vmatprep.subr.bf16.mxu0 0
    %286 = vmatpush1.bf16.msra.mxu0 0
    %287 = vmatprep.subr.bf16.mxu0 0
    %288 = vmatpush1.bf16.msra.mxu0 0
    %289 = vmatprep.subr.bf16.mxu0 0
    %290 = vmatpush1.bf16.msra.mxu0 0
    %291 = vmatprep.subr.bf16.mxu0 0
    %292 = vmatpush1.bf16.msra.mxu0 0
    %293 = vmatprep.subr.bf16.mxu0 %v229
    %294 = vmatpush1.bf16.msra.mxu0 %v228
    %295 = vmatprep.subr.bf16.mxu0 0
    %296 = vmatpush2.bf16.msra.mxu0 0
    %297 = vmatprep.subr.bf16.mxu0 0
    %298 = vmatpush2.bf16.msra.mxu0 0
    %299 = vmatprep.subr.bf16.mxu0 0
    %300 = vmatpush2.bf16.msra.mxu0 0
    %301 = vmatprep.subr.bf16.mxu0 0
    %302 = vmatpush2.bf16.msra.mxu0 0
    %303 = vmatprep.subr.bf16.mxu0 0
    %304 = vmatpush2.bf16.msra.mxu0 0
    %305 = vmatprep.subr.bf16.mxu0 0
    %306 = vmatpush2.bf16.msra.mxu0 0
    %307 = vmatprep.subr.bf16.mxu0 0
    %308 = vmatpush2.bf16.msra.mxu0 0
    %309 = vmatprep.subr.bf16.mxu0 0
    %310 = vmatpush2.bf16.msra.mxu0 0
    %311 = vmatprep.mubr.bf16.mxu0 0
    %312 = vmatmul.mubr.bf16.gmra.mxu0 %v236
    %v313 = vpop.f32.mrf.mxu0
    %v314 = vadd.f32 %v208, %v313
    %v315 = vpop.f32.mrf.mxu0
    %v316 = vadd.f32 %v210, %v315
    %v317 = vpop.f32.mrf.mxu0
    %v318 = vpop.f32.mrf.mxu0
    %319 = vdwg.mxu0
    %v320 = vld [vmem:[%s4] sm:$0xf]
    %v321 = vunpack.c.l.bf16 %v320
    %v323 = vlaneseq
    %v324 = vshrl.u32 %v323, 7
    %v325 = vsub.s32 0, %v324
    %v326 = vrot.slane %v321, %v325
    %v327 = vlaneseq
    %v328 = vshrl.u32 %v327, 7
    %v329 = vsub.s32 2, %v328
    %v330 = vrot.slane %v321, %v329
    %v331 = vlaneseq
    %v332 = vshrl.u32 %v331, 7
    %v333 = vsub.s32 4, %v332
    %v334 = vrot.slane %v321, %v333
    %v335 = vlaneseq
    %v336 = vshrl.u32 %v335, 7
    %v337 = vsub.s32 6, %v336
    %v338 = vrot.slane %v321, %v337
    %v343 = vlaneseq
    %v344 = vshrl.u32 %v343, 7
    %v345 = vsub.s32 0, %v344
    %v346 = vrot.slane %v326, %v345
    %v347 = vlaneseq
    %v348 = vshrl.u32 %v347, 7
    %v349 = vsub.s32 0, %v348
    %v350 = vrot.slane %v330, %v349
    %v351 = vlaneseq
    %v352 = vshrl.u32 %v351, 7
    %v353 = vsub.s32 0, %v352
    %v354 = vrot.slane %v334, %v353
    %v355 = vlaneseq
    %v356 = vshrl.u32 %v355, 7
    %v357 = vsub.s32 0, %v356
    %v358 = vrot.slane %v338, %v357
    %v359 = vadd.f32 %v273, %v346
    %v360 = vadd.f32 %v275, %v350
    %v361 = vadd.f32 %v314, %v354
    %v362 = vadd.f32 %v316, %v358
    %v363 = vmax.f32 %v359, 0.0
    %v364 = vmax.f32 %v360, 0.0
    %v365 = vmax.f32 %v361, 0.0
    %v366 = vmax.f32 %v362, 0.0
    %v367 = vpack.c.bf16 %v363, %v363
    %v368 = vpack.c.bf16 %v364, %v364
    %v369 = vpack.c.bf16 %v365, %v365
    %v370 = vpack.c.bf16 %v366, %v366
    %v371 = vld [vmem:[#allocation10] sm:$0xff]
    %v372 = vld [vmem:[#allocation10 + $0x8] sm:$0xf]
    %v373 = vld [vmem:[#allocation10 + $0xc] sm:$0xff]
    %v374 = vld [vmem:[#allocation10 + $0x14] sm:$0xf]
    %v375 = vld [vmem:[#allocation10 + $0x18] sm:$0xff]
    %v376 = vld [vmem:[#allocation10 + $0x20] sm:$0xf]
    %v377 = vld [vmem:[#allocation10 + $0x24] sm:$0xff]
    %v378 = vld [vmem:[#allocation10 + $0x2c] sm:$0xf]
    %v379 = vld [vmem:[#allocation10 + $0x30] sm:$0xff]
    %v380 = vld [vmem:[#allocation10 + $0x38] sm:$0xf]
    %v381 = vld [vmem:[#allocation10 + $0x3c] sm:$0xff]
    %v382 = vld [vmem:[#allocation10 + $0x44] sm:$0xf]
    %v383 = vld [vmem:[#allocation10 + $0x48] sm:$0xff]
    %v384 = vld [vmem:[#allocation10 + $0x50] sm:$0xf]
    %v385 = vld [vmem:[#allocation10 + $0x54] sm:$0xff]
    %v386 = vld [vmem:[#allocation10 + $0x5c] sm:$0xf]
    %v387 = vld [vmem:[#allocation10 + $0x60] sm:$0xff]
    %v388 = vld [vmem:[#allocation10 + $0x68] sm:$0xf]
    %v389 = vld [vmem:[#allocation10 + $0x6c] sm:$0xff]
    %v390 = vld [vmem:[#allocation10 + $0x74] sm:$0xf]
    %v391 = vld [vmem:[#allocation10 + $0x78] sm:$0xff]
    %v392 = vld [vmem:[#allocation10 + $0x80] sm:$0xf]
    %v393 = vld [vmem:[#allocation10 + $0x84] sm:$0xff]
    %v394 = vld [vmem:[#allocation10 + $0x8c] sm:$0xf]
    %v395 = vld [vmem:[#allocation10 + $0x90] sm:$0xff]
    %v396 = vld [vmem:[#allocation10 + $0x98] sm:$0xf]
    %v397 = vld [vmem:[#allocation10 + $0x9c] sm:$0xff]
    %v398 = vld [vmem:[#allocation10 + $0xa4] sm:$0xf]
    %v399 = vld [vmem:[#allocation10 + $0xa8] sm:$0xff]
    %v400 = vld [vmem:[#allocation10 + $0xb0] sm:$0xf]
    %v401 = vld [vmem:[#allocation10 + $0xb4] sm:$0xff]
    %v402 = vld [vmem:[#allocation10 + $0xbc] sm:$0xf]
    %v403 = vld [vmem:[#allocation10 + $0xc0] sm:$0xff]
    %v404 = vld [vmem:[#allocation10 + $0xc8] sm:$0xf]
    %v405 = vld [vmem:[#allocation10 + $0xcc] sm:$0xff]
    %v406 = vld [vmem:[#allocation10 + $0xd4] sm:$0xf]
    %v407 = vld [vmem:[#allocation10 + $0xd8] sm:$0xff]
    %v408 = vld [vmem:[#allocation10 + $0xe0] sm:$0xf]
    %v409 = vld [vmem:[#allocation10 + $0xe4] sm:$0xff]
    %v410 = vld [vmem:[#allocation10 + $0xec] sm:$0xf]
    %v411 = vld [vmem:[#allocation10 + $0xf0] sm:$0xff]
    %v412 = vld [vmem:[#allocation10 + $0xf8] sm:$0xf]
    %v413 = vld [vmem:[#allocation10 + $0xfc] sm:$0xff]
    %v414 = vld [vmem:[#allocation10 + $0x104] sm:$0xf]
    %v415 = vld [vmem:[#allocation10 + $0x108] sm:$0xff]
    %v416 = vld [vmem:[#allocation10 + $0x110] sm:$0xf]
    %v417 = vld [vmem:[#allocation10 + $0x114] sm:$0xff]
    %v418 = vld [vmem:[#allocation10 + $0x11c] sm:$0xf]
    %v419 = vld [vmem:[#allocation10 + $0x120] sm:$0xff]
    %v420 = vld [vmem:[#allocation10 + $0x128] sm:$0xf]
    %v421 = vld [vmem:[#allocation10 + $0x12c] sm:$0xff]
    %v422 = vld [vmem:[#allocation10 + $0x134] sm:$0xf]
    %v423 = vld [vmem:[#allocation10 + $0x138] sm:$0xff]
    %v424 = vld [vmem:[#allocation10 + $0x140] sm:$0xf]
    %v425 = vld [vmem:[#allocation10 + $0x144] sm:$0xff]
    %v426 = vld [vmem:[#allocation10 + $0x14c] sm:$0xf]
    %v427 = vld [vmem:[#allocation10 + $0x150] sm:$0xff]
    %v428 = vld [vmem:[#allocation10 + $0x158] sm:$0xf]
    %v429 = vld [vmem:[#allocation10 + $0x15c] sm:$0xff]
    %v430 = vld [vmem:[#allocation10 + $0x164] sm:$0xf]
    %v431 = vld [vmem:[#allocation10 + $0x168] sm:$0xff]
    %v432 = vld [vmem:[#allocation10 + $0x170] sm:$0xf]
    %v433 = vld [vmem:[#allocation10 + $0x174] sm:$0xff]
    %v434 = vld [vmem:[#allocation10 + $0x17c] sm:$0xf]
    %v435 = vld [vmem:[#allocation10 + $0x180] sm:$0xff]
    %v436 = vld [vmem:[#allocation10 + $0x188] sm:$0xf]
    %v437 = vld [vmem:[#allocation10 + $0x18c] sm:$0xff]
    %v438 = vld [vmem:[#allocation10 + $0x194] sm:$0xf]
    %v439 = vld [vmem:[#allocation10 + $0x198] sm:$0xff]
    %v440 = vld [vmem:[#allocation10 + $0x1a0] sm:$0xf]
    %v441 = vld [vmem:[#allocation10 + $0x1a4] sm:$0xff]
    %v442 = vld [vmem:[#allocation10 + $0x1ac] sm:$0xf]
    %v443 = vld [vmem:[#allocation10 + $0x1b0] sm:$0xff]
    %v444 = vld [vmem:[#allocation10 + $0x1b8] sm:$0xf]
    %v445 = vld [vmem:[#allocation10 + $0x1bc] sm:$0xff]
    %v446 = vld [vmem:[#allocation10 + $0x1c4] sm:$0xf]
    %v447 = vld [vmem:[#allocation10 + $0x1c8] sm:$0xff]
    %v448 = vld [vmem:[#allocation10 + $0x1d0] sm:$0xf]
    %v449 = vld [vmem:[#allocation10 + $0x1d4] sm:$0xff]
    %v450 = vld [vmem:[#allocation10 + $0x1dc] sm:$0xf]
    %v451 = vld [vmem:[#allocation10 + $0x1e0] sm:$0xff]
    %v452 = vld [vmem:[#allocation10 + $0x1e8] sm:$0xf]
    %v453 = vld [vmem:[#allocation10 + $0x1ec] sm:$0xff]
    %v454 = vld [vmem:[#allocation10 + $0x1f4] sm:$0xf]
    %v455 = vld [vmem:[#allocation10 + $0x1f8] sm:$0xff]
    %v456 = vld [vmem:[#allocation10 + $0x200] sm:$0xf]
    %v457 = vld [vmem:[#allocation10 + $0x204] sm:$0xff]
    %v458 = vld [vmem:[#allocation10 + $0x20c] sm:$0xf]
    %v459 = vld [vmem:[#allocation10 + $0x210] sm:$0xff]
    %v460 = vld [vmem:[#allocation10 + $0x218] sm:$0xf]
    %v461 = vld [vmem:[#allocation10 + $0x21c] sm:$0xff]
    %v462 = vld [vmem:[#allocation10 + $0x224] sm:$0xf]
    %v463 = vld [vmem:[#allocation10 + $0x228] sm:$0xff]
    %v464 = vld [vmem:[#allocation10 + $0x230] sm:$0xf]
    %v465 = vld [vmem:[#allocation10 + $0x234] sm:$0xff]
    %v466 = vld [vmem:[#allocation10 + $0x23c] sm:$0xf]
    %v467 = vld [vmem:[#allocation10 + $0x240] sm:$0xff]
    %v468 = vld [vmem:[#allocation10 + $0x248] sm:$0xf]
    %v469 = vld [vmem:[#allocation10 + $0x24c] sm:$0xff]
    %v470 = vld [vmem:[#allocation10 + $0x254] sm:$0xf]
    %v471 = vld [vmem:[#allocation10 + $0x258] sm:$0xff]
    %v472 = vld [vmem:[#allocation10 + $0x260] sm:$0xf]
    %v473 = vld [vmem:[#allocation10 + $0x264] sm:$0xff]
    %v474 = vld [vmem:[#allocation10 + $0x26c] sm:$0xf]
    %v475 = vld [vmem:[#allocation10 + $0x270] sm:$0xff]
    %v476 = vld [vmem:[#allocation10 + $0x278] sm:$0xf]
    %v477 = vld [vmem:[#allocation10 + $0x27c] sm:$0xff]
    %v478 = vld [vmem:[#allocation10 + $0x284] sm:$0xf]
    %v479 = vld [vmem:[#allocation10 + $0x288] sm:$0xff]
    %v480 = vld [vmem:[#allocation10 + $0x290] sm:$0xf]
    %v481 = vld [vmem:[#allocation10 + $0x294] sm:$0xff]
    %v482 = vld [vmem:[#allocation10 + $0x29c] sm:$0xf]
    %v483 = vld [vmem:[#allocation10 + $0x2a0] sm:$0xff]
    %v484 = vld [vmem:[#allocation10 + $0x2a8] sm:$0xf]
    %v485 = vld [vmem:[#allocation10 + $0x2ac] sm:$0xff]
    %v486 = vld [vmem:[#allocation10 + $0x2b4] sm:$0xf]
    %v487 = vld [vmem:[#allocation10 + $0x2b8] sm:$0xff]
    %v488 = vld [vmem:[#allocation10 + $0x2c0] sm:$0xf]
    %v489 = vld [vmem:[#allocation10 + $0x2c4] sm:$0xff]
    %v490 = vld [vmem:[#allocation10 + $0x2cc] sm:$0xf]
    %v491 = vld [vmem:[#allocation10 + $0x2d0] sm:$0xff]
    %v492 = vld [vmem:[#allocation10 + $0x2d8] sm:$0xf]
    %v493 = vld [vmem:[#allocation10 + $0x2dc] sm:$0xff]
    %v494 = vld [vmem:[#allocation10 + $0x2e4] sm:$0xf]
    %v495 = vld [vmem:[#allocation10 + $0x2e8] sm:$0xff]
    %v496 = vld [vmem:[#allocation10 + $0x2f0] sm:$0xf]
    %v497 = vld [vmem:[#allocation10 + $0x2f4] sm:$0xff]
    %v498 = vld [vmem:[#allocation10 + $0x2fc] sm:$0xf]
    %v499 = vld [vmem:[%s6] sm:$0x7]
    %v500 = vunpack.c.l.bf16 %v499
    %v502 = vlaneseq
    %v503 = vshrl.u32 %v502, 7
    %v504 = vsub.s32 0, %v503
    %v505 = vrot.slane %v500, %v504
    %v506 = vlaneseq
    %v507 = vshrl.u32 %v506, 7
    %v508 = vsub.s32 2, %v507
    %v509 = vrot.slane %v500, %v508
    %v510 = vlaneseq
    %v511 = vshrl.u32 %v510, 7
    %v512 = vsub.s32 4, %v511
    %v513 = vrot.slane %v500, %v512
    %v517 = vlaneseq
    %v518 = vshrl.u32 %v517, 7
    %v519 = vsub.s32 0, %v518
    %v520 = vrot.slane %v505, %v519
    %v521 = vlaneseq
    %v522 = vshrl.u32 %v521, 7
    %v523 = vsub.s32 0, %v522
    %v524 = vrot.slane %v509, %v523
    %v525 = vlaneseq
    %v526 = vshrl.u32 %v525, 7
    %v527 = vsub.s32 0, %v526
    %v528 = vrot.slane %v513, %v527
    %v657 = vunpack.c.l.b16 %v371
    %v658 = vunpack.c.h.b16 %v371
    %v659 = vunpack.c.l.b16 %v372
    %v660 = vunpack.c.l.b16 %v373
    %v661 = vunpack.c.h.b16 %v373
    %v662 = vunpack.c.l.b16 %v374
    %v663 = vunpack.c.l.b16 %v375
    %v664 = vunpack.c.h.b16 %v375
    %v665 = vunpack.c.l.b16 %v376
    %v666 = vunpack.c.l.b16 %v377
    %v667 = vunpack.c.h.b16 %v377
    %v668 = vunpack.c.l.b16 %v378
    %v669 = vunpack.c.l.b16 %v379
    %v670 = vunpack.c.h.b16 %v379
    %v671 = vunpack.c.l.b16 %v380
    %v672 = vunpack.c.l.b16 %v381
    %v673 = vunpack.c.h.b16 %v381
    %v674 = vunpack.c.l.b16 %v382
    %v675 = vunpack.c.l.b16 %v383
    %v676 = vunpack.c.h.b16 %v383
    %v677 = vunpack.c.l.b16 %v384
    %v678 = vunpack.c.l.b16 %v385
    %v679 = vunpack.c.h.b16 %v385
    %v680 = vunpack.c.l.b16 %v386
    %v681 = vunpack.c.l.b16 %v387
    %v682 = vunpack.c.h.b16 %v387
    %v683 = vunpack.c.l.b16 %v388
    %v684 = vunpack.c.l.b16 %v389
    %v685 = vunpack.c.h.b16 %v389
    %v686 = vunpack.c.l.b16 %v390
    %v687 = vunpack.c.l.b16 %v391
    %v688 = vunpack.c.h.b16 %v391
    %v689 = vunpack.c.l.b16 %v392
    %v690 = vunpack.c.l.b16 %v393
    %v691 = vunpack.c.h.b16 %v393
    %v692 = vunpack.c.l.b16 %v394
    %v693 = vunpack.c.l.b16 %v395
    %v694 = vunpack.c.h.b16 %v395
    %v695 = vunpack.c.l.b16 %v396
    %v696 = vunpack.c.l.b16 %v397
    %v697 = vunpack.c.h.b16 %v397
    %v698 = vunpack.c.l.b16 %v398
    %v699 = vunpack.c.l.b16 %v399
    %v700 = vunpack.c.h.b16 %v399
    %v701 = vunpack.c.l.b16 %v400
    %v702 = vunpack.c.l.b16 %v401
    %v703 = vunpack.c.h.b16 %v401
    %v704 = vunpack.c.l.b16 %v402
    %v705 = vunpack.c.l.b16 %v403
    %v706 = vunpack.c.h.b16 %v403
    %v707 = vunpack.c.l.b16 %v404
    %v708 = vunpack.c.l.b16 %v405
    %v709 = vunpack.c.h.b16 %v405
    %v710 = vunpack.c.l.b16 %v406
    %v711 = vunpack.c.l.b16 %v407
    %v712 = vunpack.c.h.b16 %v407
    %v713 = vunpack.c.l.b16 %v408
    %v714 = vunpack.c.l.b16 %v409
    %v715 = vunpack.c.h.b16 %v409
    %v716 = vunpack.c.l.b16 %v410
    %v717 = vunpack.c.l.b16 %v411
    %v718 = vunpack.c.h.b16 %v411
    %v719 = vunpack.c.l.b16 %v412
    %v720 = vunpack.c.l.b16 %v413
    %v721 = vunpack.c.h.b16 %v413
    %v722 = vunpack.c.l.b16 %v414
    %v723 = vunpack.c.l.b16 %v415
    %v724 = vunpack.c.h.b16 %v415
    %v725 = vunpack.c.l.b16 %v416
    %v726 = vunpack.c.l.b16 %v417
    %v727 = vunpack.c.h.b16 %v417
    %v728 = vunpack.c.l.b16 %v418
    %v729 = vunpack.c.l.b16 %v419
    %v730 = vunpack.c.h.b16 %v419
    %v731 = vunpack.c.l.b16 %v420
    %v732 = vunpack.c.l.b16 %v421
    %v733 = vunpack.c.h.b16 %v421
    %v734 = vunpack.c.l.b16 %v422
    %v735 = vunpack.c.l.b16 %v423
    %v736 = vunpack.c.h.b16 %v423
    %v737 = vunpack.c.l.b16 %v424
    %v738 = vunpack.c.l.b16 %v425
    %v739 = vunpack.c.h.b16 %v425
    %v740 = vunpack.c.l.b16 %v426
    %v741 = vunpack.c.l.b16 %v427
    %v742 = vunpack.c.h.b16 %v427
    %v743 = vunpack.c.l.b16 %v428
    %v744 = vunpack.c.l.b16 %v429
    %v745 = vunpack.c.h.b16 %v429
    %v746 = vunpack.c.l.b16 %v430
    %v747 = vunpack.c.l.b16 %v431
    %v748 = vunpack.c.h.b16 %v431
    %v749 = vunpack.c.l.b16 %v432
    %v750 = vunpack.c.l.b16 %v433
    %v751 = vunpack.c.h.b16 %v433
    %v752 = vunpack.c.l.b16 %v434
    %v753 = vunpack.c.l.b16 %v435
    %v754 = vunpack.c.h.b16 %v435
    %v755 = vunpack.c.l.b16 %v436
    %v756 = vunpack.c.l.b16 %v437
    %v757 = vunpack.c.h.b16 %v437
    %v758 = vunpack.c.l.b16 %v438
    %v759 = vunpack.c.l.b16 %v439
    %v760 = vunpack.c.h.b16 %v439
    %v761 = vunpack.c.l.b16 %v440
    %v762 = vunpack.c.l.b16 %v441
    %v763 = vunpack.c.h.b16 %v441
    %v764 = vunpack.c.l.b16 %v442
    %v765 = vunpack.c.l.b16 %v443
    %v766 = vunpack.c.h.b16 %v443
    %v767 = vunpack.c.l.b16 %v444
    %v768 = vunpack.c.l.b16 %v445
    %v769 = vunpack.c.h.b16 %v445
    %v770 = vunpack.c.l.b16 %v446
    %v771 = vunpack.c.l.b16 %v447
    %v772 = vunpack.c.h.b16 %v447
    %v773 = vunpack.c.l.b16 %v448
    %v774 = vunpack.c.l.b16 %v449
    %v775 = vunpack.c.h.b16 %v449
    %v776 = vunpack.c.l.b16 %v450
    %v777 = vunpack.c.l.b16 %v451
    %v778 = vunpack.c.h.b16 %v451
    %v779 = vunpack.c.l.b16 %v452
    %v780 = vunpack.c.l.b16 %v453
    %v781 = vunpack.c.h.b16 %v453
    %v782 = vunpack.c.l.b16 %v454
    %v783 = vunpack.c.l.b16 %v455
    %v784 = vunpack.c.h.b16 %v455
    %v785 = vunpack.c.l.b16 %v456
    %v786 = vunpack.c.l.b16 %v457
    %v787 = vunpack.c.h.b16 %v457
    %v788 = vunpack.c.l.b16 %v458
    %v789 = vunpack.c.l.b16 %v459
    %v790 = vunpack.c.h.b16 %v459
    %v791 = vunpack.c.l.b16 %v460
    %v792 = vunpack.c.l.b16 %v461
    %v793 = vunpack.c.h.b16 %v461
    %v794 = vunpack.c.l.b16 %v462
    %v795 = vunpack.c.l.b16 %v463
    %v796 = vunpack.c.h.b16 %v463
    %v797 = vunpack.c.l.b16 %v464
    %v798 = vunpack.c.l.b16 %v465
    %v799 = vunpack.c.h.b16 %v465
    %v800 = vunpack.c.l.b16 %v466
    %v801 = vunpack.c.l.b16 %v467
    %v802 = vunpack.c.h.b16 %v467
    %v803 = vunpack.c.l.b16 %v468
    %v804 = vunpack.c.l.b16 %v469
    %v805 = vunpack.c.h.b16 %v469
    %v806 = vunpack.c.l.b16 %v470
    %v807 = vunpack.c.l.b16 %v471
    %v808 = vunpack.c.h.b16 %v471
    %v809 = vunpack.c.l.b16 %v472
    %v810 = vunpack.c.l.b16 %v473
    %v811 = vunpack.c.h.b16 %v473
    %v812 = vunpack.c.l.b16 %v474
    %v813 = vunpack.c.l.b16 %v475
    %v814 = vunpack.c.h.b16 %v475
    %v815 = vunpack.c.l.b16 %v476
    %v816 = vunpack.c.l.b16 %v477
    %v817 = vunpack.c.h.b16 %v477
    %v818 = vunpack.c.l.b16 %v478
    %v819 = vunpack.c.l.b16 %v479
    %v820 = vunpack.c.h.b16 %v479
    %v821 = vunpack.c.l.b16 %v480
    %v822 = vunpack.c.l.b16 %v481
    %v823 = vunpack.c.h.b16 %v481
    %v824 = vunpack.c.l.b16 %v482
    %v825 = vunpack.c.l.b16 %v483
    %v826 = vunpack.c.h.b16 %v483
    %v827 = vunpack.c.l.b16 %v484
    %v828 = vunpack.c.l.b16 %v485
    %v829 = vunpack.c.h.b16 %v485
    %v830 = vunpack.c.l.b16 %v486
    %v831 = vunpack.c.l.b16 %v487
    %v832 = vunpack.c.h.b16 %v487
    %v833 = vunpack.c.l.b16 %v488
    %v834 = vunpack.c.l.b16 %v489
    %v835 = vunpack.c.h.b16 %v489
    %v836 = vunpack.c.l.b16 %v490
    %v837 = vunpack.c.l.b16 %v491
    %v838 = vunpack.c.h.b16 %v491
    %v839 = vunpack.c.l.b16 %v492
    %v840 = vunpack.c.l.b16 %v493
    %v841 = vunpack.c.h.b16 %v493
    %v842 = vunpack.c.l.b16 %v494
    %v843 = vunpack.c.l.b16 %v495
    %v844 = vunpack.c.h.b16 %v495
    %v845 = vunpack.c.l.b16 %v496
    %v846 = vunpack.c.l.b16 %v497
    %v847 = vunpack.c.h.b16 %v497
    %v848 = vunpack.c.l.b16 %v498
    %v849 = vpack.c.b16 %v660, %v657
    %v850 = vpack.c.b16 %v661, %v658
    %v851 = vpack.c.b16 %v662, %v659
    %v852 = vpack.c.b16 %v666, %v663
    %v853 = vpack.c.b16 %v667, %v664
    %v854 = vpack.c.b16 %v668, %v665
    %v855 = vpack.c.b16 %v672, %v669
    %v856 = vpack.c.b16 %v673, %v670
    %v857 = vpack.c.b16 %v674, %v671
    %v858 = vpack.c.b16 %v678, %v675
    %v859 = vpack.c.b16 %v679, %v676
    %v860 = vpack.c.b16 %v680, %v677
    %v861 = vpack.c.b16 %v684, %v681
    %v862 = vpack.c.b16 %v685, %v682
    %v863 = vpack.c.b16 %v686, %v683
    %v864 = vpack.c.b16 %v690, %v687
    %v865 = vpack.c.b16 %v691, %v688
    %v866 = vpack.c.b16 %v692, %v689
    %v867 = vpack.c.b16 %v696, %v693
    %v868 = vpack.c.b16 %v697, %v694
    %v869 = vpack.c.b16 %v698, %v695
    %v870 = vpack.c.b16 %v702, %v699
    %v871 = vpack.c.b16 %v703, %v700
    %v872 = vpack.c.b16 %v704, %v701
    %v873 = vpack.c.b16 %v708, %v705
    %v874 = vpack.c.b16 %v709, %v706
    %v875 = vpack.c.b16 %v710, %v707
    %v876 = vpack.c.b16 %v714, %v711
    %v877 = vpack.c.b16 %v715, %v712
    %v878 = vpack.c.b16 %v716, %v713
    %v879 = vpack.c.b16 %v720, %v717
    %v880 = vpack.c.b16 %v721, %v718
    %v881 = vpack.c.b16 %v722, %v719
    %v882 = vpack.c.b16 %v726, %v723
    %v883 = vpack.c.b16 %v727, %v724
    %v884 = vpack.c.b16 %v728, %v725
    %v885 = vpack.c.b16 %v732, %v729
    %v886 = vpack.c.b16 %v733, %v730
    %v887 = vpack.c.b16 %v734, %v731
    %v888 = vpack.c.b16 %v738, %v735
    %v889 = vpack.c.b16 %v739, %v736
    %v890 = vpack.c.b16 %v740, %v737
    %v891 = vpack.c.b16 %v744, %v741
    %v892 = vpack.c.b16 %v745, %v742
    %v893 = vpack.c.b16 %v746, %v743
    %v894 = vpack.c.b16 %v750, %v747
    %v895 = vpack.c.b16 %v751, %v748
    %v896 = vpack.c.b16 %v752, %v749
    %v897 = vpack.c.b16 %v756, %v753
    %v898 = vpack.c.b16 %v757, %v754
    %v899 = vpack.c.b16 %v758, %v755
    %v900 = vpack.c.b16 %v762, %v759
    %v901 = vpack.c.b16 %v763, %v760
    %v902 = vpack.c.b16 %v764, %v761
    %v903 = vpack.c.b16 %v768, %v765
    %v904 = vpack.c.b16 %v769, %v766
    %v905 = vpack.c.b16 %v770, %v767
    %v906 = vpack.c.b16 %v774, %v771
    %v907 = vpack.c.b16 %v775, %v772
    %v908 = vpack.c.b16 %v776, %v773
    %v909 = vpack.c.b16 %v780, %v777
    %v910 = vpack.c.b16 %v781, %v778
    %v911 = vpack.c.b16 %v782, %v779
    %v912 = vpack.c.b16 %v786, %v783
    %v913 = vpack.c.b16 %v787, %v784
    %v914 = vpack.c.b16 %v788, %v785
    %v915 = vpack.c.b16 %v792, %v789
    %v916 = vpack.c.b16 %v793, %v790
    %v917 = vpack.c.b16 %v794, %v791
    %v918 = vpack.c.b16 %v798, %v795
    %v919 = vpack.c.b16 %v799, %v796
    %v920 = vpack.c.b16 %v800, %v797
    %v921 = vpack.c.b16 %v804, %v801
    %v922 = vpack.c.b16 %v805, %v802
    %v923 = vpack.c.b16 %v806, %v803
    %v924 = vpack.c.b16 %v810, %v807
    %v925 = vpack.c.b16 %v811, %v808
    %v926 = vpack.c.b16 %v812, %v809
    %v927 = vpack.c.b16 %v816, %v813
    %v928 = vpack.c.b16 %v817, %v814
    %v929 = vpack.c.b16 %v818, %v815
    %v930 = vpack.c.b16 %v822, %v819
    %v931 = vpack.c.b16 %v823, %v820
    %v932 = vpack.c.b16 %v824, %v821
    %v933 = vpack.c.b16 %v828, %v825
    %v934 = vpack.c.b16 %v829, %v826
    %v935 = vpack.c.b16 %v830, %v827
    %v936 = vpack.c.b16 %v834, %v831
    %v937 = vpack.c.b16 %v835, %v832
    %v938 = vpack.c.b16 %v836, %v833
    %v939 = vpack.c.b16 %v840, %v837
    %v940 = vpack.c.b16 %v841, %v838
    %v941 = vpack.c.b16 %v842, %v839
    %v942 = vpack.c.b16 %v846, %v843
    %v943 = vpack.c.b16 %v847, %v844
    %v944 = vpack.c.b16 %v848, %v845
    %1041 = vmatprep.subr.bf16.mxu0 %v871
    %1042 = vmatpush1.bf16.msra.mxu0 %v870
    %1043 = vmatprep.subr.bf16.mxu0 %v868
    %1044 = vmatpush1.bf16.msra.mxu0 %v867
    %1045 = vmatprep.subr.bf16.mxu0 %v865
    %1046 = vmatpush1.bf16.msra.mxu0 %v864
    %1047 = vmatprep.subr.bf16.mxu0 %v862
    %1048 = vmatpush1.bf16.msra.mxu0 %v861
    %1049 = vmatprep.subr.bf16.mxu0 %v859
    %1050 = vmatpush1.bf16.msra.mxu0 %v858
    %1051 = vmatprep.subr.bf16.mxu0 %v856
    %1052 = vmatpush1.bf16.msra.mxu0 %v855
    %1053 = vmatprep.subr.bf16.mxu0 %v853
    %1054 = vmatpush1.bf16.msra.mxu0 %v852
    %1055 = vmatprep.subr.bf16.mxu0 %v850
    %1056 = vmatpush1.bf16.msra.mxu0 %v849
    %1057 = vmatprep.subr.bf16.mxu0 %v895
    %1058 = vmatpush2.bf16.msra.mxu0 %v894
    %1059 = vmatprep.subr.bf16.mxu0 %v892
    %1060 = vmatpush2.bf16.msra.mxu0 %v891
    %1061 = vmatprep.subr.bf16.mxu0 %v889
    %1062 = vmatpush2.bf16.msra.mxu0 %v888
    %1063 = vmatprep.subr.bf16.mxu0 %v886
    %1064 = vmatpush2.bf16.msra.mxu0 %v885
    %1065 = vmatprep.subr.bf16.mxu0 %v883
    %1066 = vmatpush2.bf16.msra.mxu0 %v882
    %1067 = vmatprep.subr.bf16.mxu0 %v880
    %1068 = vmatpush2.bf16.msra.mxu0 %v879
    %1069 = vmatprep.subr.bf16.mxu0 %v877
    %1070 = vmatpush2.bf16.msra.mxu0 %v876
    %1071 = vmatprep.subr.bf16.mxu0 %v874
    %1072 = vmatpush2.bf16.msra.mxu0 %v873
    %1073 = vmatprep.mubr.bf16.mxu0 %v368
    %1074 = vmatmul.mubr.bf16.gmra.mxu0 %v367
    %v1075 = vpop.f32.mrf.mxu0
    %v1076 = vadd.f32 %v520, %v1075
    %v1077 = vpop.f32.mrf.mxu0
    %v1078 = vadd.f32 %v524, %v1077
    %v1079 = vpop.f32.mrf.mxu0
    %v1080 = vpop.f32.mrf.mxu0
    %1081 = vdwg.mxu0
    %1082 = vmatprep.subr.bf16.mxu0 %v919
    %1083 = vmatpush1.bf16.msra.mxu0 %v918
    %1084 = vmatprep.subr.bf16.mxu0 %v916
    %1085 = vmatpush1.bf16.msra.mxu0 %v915
    %1086 = vmatprep.subr.bf16.mxu0 %v913
    %1087 = vmatpush1.bf16.msra.mxu0 %v912
    %1088 = vmatprep.subr.bf16.mxu0 %v910
    %1089 = vmatpush1.bf16.msra.mxu0 %v909
    %1090 = vmatprep.subr.bf16.mxu0 %v907
    %1091 = vmatpush1.bf16.msra.mxu0 %v906
    %1092 = vmatprep.subr.bf16.mxu0 %v904
    %1093 = vmatpush1.bf16.msra.mxu0 %v903
    %1094 = vmatprep.subr.bf16.mxu0 %v901
    %1095 = vmatpush1.bf16.msra.mxu0 %v900
    %1096 = vmatprep.subr.bf16.mxu0 %v898
    %1097 = vmatpush1.bf16.msra.mxu0 %v897
    %1098 = vmatprep.subr.bf16.mxu0 %v943
    %1099 = vmatpush2.bf16.msra.mxu0 %v942
    %1100 = vmatprep.subr.bf16.mxu0 %v940
    %1101 = vmatpush2.bf16.msra.mxu0 %v939
    %1102 = vmatprep.subr.bf16.mxu0 %v937
    %1103 = vmatpush2.bf16.msra.mxu0 %v936
    %1104 = vmatprep.subr.bf16.mxu0 %v934
    %1105 = vmatpush2.bf16.msra.mxu0 %v933
    %1106 = vmatprep.subr.bf16.mxu0 %v931
    %1107 = vmatpush2.bf16.msra.mxu0 %v930
    %1108 = vmatprep.subr.bf16.mxu0 %v928
    %1109 = vmatpush2.bf16.msra.mxu0 %v927
    %1110 = vmatprep.subr.bf16.mxu0 %v925
    %1111 = vmatpush2.bf16.msra.mxu0 %v924
    %1112 = vmatprep.subr.bf16.mxu0 %v922
    %1113 = vmatpush2.bf16.msra.mxu0 %v921
    %1114 = vmatprep.mubr.bf16.mxu0 %v370
    %1115 = vmatmul.mubr.bf16.gmra.mxu0 %v369
    %v1116 = vpop.f32.mrf.mxu0
    %v1117 = vadd.f32 %v1076, %v1116
    %v1118 = vpop.f32.mrf.mxu0
    %v1119 = vadd.f32 %v1078, %v1118
    %v1120 = vpop.f32.mrf.mxu0
    %v1121 = vpop.f32.mrf.mxu0
    %1122 = vdwg.mxu0
    %1123 = vmatprep.subr.bf16.mxu0 0
    %1124 = vmatpush1.bf16.msra.mxu0 %v872
    %1125 = vmatprep.subr.bf16.mxu0 0
    %1126 = vmatpush1.bf16.msra.mxu0 %v869
    %1127 = vmatprep.subr.bf16.mxu0 0
    %1128 = vmatpush1.bf16.msra.mxu0 %v866
    %1129 = vmatprep.subr.bf16.mxu0 0
    %1130 = vmatpush1.bf16.msra.mxu0 %v863
    %1131 = vmatprep.subr.bf16.mxu0 0
    %1132 = vmatpush1.bf16.msra.mxu0 %v860
    %1133 = vmatprep.subr.bf16.mxu0 0
    %1134 = vmatpush1.bf16.msra.mxu0 %v857
    %1135 = vmatprep.subr.bf16.mxu0 0
    %1136 = vmatpush1.bf16.msra.mxu0 %v854
    %1137 = vmatprep.subr.bf16.mxu0 0
    %1138 = vmatpush1.bf16.msra.mxu0 %v851
    %1139 = vmatprep.subr.bf16.mxu0 0
    %1140 = vmatpush2.bf16.msra.mxu0 %v896
    %1141 = vmatprep.subr.bf16.mxu0 0
    %1142 = vmatpush2.bf16.msra.mxu0 %v893
    %1143 = vmatprep.subr.bf16.mxu0 0
    %1144 = vmatpush2.bf16.msra.mxu0 %v890
    %1145 = vmatprep.subr.bf16.mxu0 0
    %1146 = vmatpush2.bf16.msra.mxu0 %v887
    %1147 = vmatprep.subr.bf16.mxu0 0
    %1148 = vmatpush2.bf16.msra.mxu0 %v884
    %1149 = vmatprep.subr.bf16.mxu0 0
    %1150 = vmatpush2.bf16.msra.mxu0 %v881
    %1151 = vmatprep.subr.bf16.mxu0 0
    %1152 = vmatpush2.bf16.msra.mxu0 %v878
    %1153 = vmatprep.subr.bf16.mxu0 0
    %1154 = vmatpush2.bf16.msra.mxu0 %v875
    %1155 = vmatprep.mubr.bf16.mxu0 %v368
    %1156 = vmatmul.mubr.bf16.gmra.mxu0 %v367
    %v1157 = vpop.f32.mrf.mxu0
    %v1158 = vadd.f32 %v528, %v1157
    %v1159 = vpop.f32.mrf.mxu0
    %v1160 = vpop.f32.mrf.mxu0
    %v1161 = vpop.f32.mrf.mxu0
    %1162 = vdwg.mxu0
    %1163 = vmatprep.subr.bf16.mxu0 0
    %1164 = vmatpush1.bf16.msra.mxu0 %v920
    %1165 = vmatprep.subr.bf16.mxu0 0
    %1166 = vmatpush1.bf16.msra.mxu0 %v917
    %1167 = vmatprep.subr.bf16.mxu0 0
    %1168 = vmatpush1.bf16.msra.mxu0 %v914
    %1169 = vmatprep.subr.bf16.mxu0 0
    %1170 = vmatpush1.bf16.msra.mxu0 %v911
    %1171 = vmatprep.subr.bf16.mxu0 0
    %1172 = vmatpush1.bf16.msra.mxu0 %v908
    %1173 = vmatprep.subr.bf16.mxu0 0
    %1174 = vmatpush1.bf16.msra.mxu0 %v905
    %1175 = vmatprep.subr.bf16.mxu0 0
    %1176 = vmatpush1.bf16.msra.mxu0 %v902
    %1177 = vmatprep.subr.bf16.mxu0 0
    %1178 = vmatpush1.bf16.msra.mxu0 %v899
    %1179 = vmatprep.subr.bf16.mxu0 0
    %1180 = vmatpush2.bf16.msra.mxu0 %v944
    %1181 = vmatprep.subr.bf16.mxu0 0
    %1182 = vmatpush2.bf16.msra.mxu0 %v941
    %1183 = vmatprep.subr.bf16.mxu0 0
    %1184 = vmatpush2.bf16.msra.mxu0 %v938
    %1185 = vmatprep.subr.bf16.mxu0 0
    %1186 = vmatpush2.bf16.msra.mxu0 %v935
    %1187 = vmatprep.subr.bf16.mxu0 0
    %1188 = vmatpush2.bf16.msra.mxu0 %v932
    %1189 = vmatprep.subr.bf16.mxu0 0
    %1190 = vmatpush2.bf16.msra.mxu0 %v929
    %1191 = vmatprep.subr.bf16.mxu0 0
    %1192 = vmatpush2.bf16.msra.mxu0 %v926
    %1193 = vmatprep.subr.bf16.mxu0 0
    %1194 = vmatpush2.bf16.msra.mxu0 %v923
    %1195 = vmatprep.mubr.bf16.mxu0 %v370
    %1196 = vmatmul.mubr.bf16.gmra.mxu0 %v369
    %v1197 = vpop.f32.mrf.mxu0
    %v1198 = vadd.f32 %v1158, %v1197
    %v1199 = vpop.f32.mrf.mxu0
    %v1200 = vpop.f32.mrf.mxu0
    %v1201 = vpop.f32.mrf.mxu0
    %1202 = vdwg.mxu0
    %v1203 = vmax.f32 %v1117, 0.0
    %v1204 = vmax.f32 %v1119, 0.0
    %v1205 = vmax.f32 %v1198, 0.0
    %v1206 = vld [vmem:[%s7] sm:$0x7]
    %v1207 = vunpack.c.l.bf16 %v1206
    %v1209 = vlaneseq
    %v1210 = vshrl.u32 %v1209, 7
    %v1211 = vsub.s32 0, %v1210
    %v1212 = vrot.slane %v1207, %v1211
    %v1213 = vlaneseq
    %v1214 = vshrl.u32 %v1213, 7
    %v1215 = vsub.s32 2, %v1214
    %v1216 = vrot.slane %v1207, %v1215
    %v1217 = vlaneseq
    %v1218 = vshrl.u32 %v1217, 7
    %v1219 = vsub.s32 4, %v1218
    %v1220 = vrot.slane %v1207, %v1219
    %v1224 = vlaneseq
    %v1225 = vshrl.u32 %v1224, 7
    %v1226 = vsub.s32 0, %v1225
    %v1227 = vrot.slane %v1212, %v1226
    %v1228 = vlaneseq
    %v1229 = vshrl.u32 %v1228, 7
    %v1230 = vsub.s32 0, %v1229
    %v1231 = vrot.slane %v1216, %v1230
    %v1232 = vlaneseq
    %v1233 = vshrl.u32 %v1232, 7
    %v1234 = vsub.s32 0, %v1233
    %v1235 = vrot.slane %v1220, %v1234
    %v1236 = vmul.f32 %v1203, %v1227
    %v1237 = vmul.f32 %v1204, %v1231
    %v1238 = vmul.f32 %v1205, %v1235
    %v1239 = vsel %vm119, %v1236, 0.0
    %v1240 = vsel %vm119, %v1237, 0.0
    %v1241 = vadd.f32 %v1239, %v1240
    %v1242 = vsel %vm119, %v1238, 0.0
    %v1243 = vadd.f32 %v1241, %v1242
    %1244 = vadd.xlane.f32.xlu0 %v1243
    %v1245 = vpop.xlane.xlu0 %1244
    %v1246 = vld [vmem:[#allocation2] sm:$0x1]
    %v1248 = vlaneseq
    %v1249 = vshrl.u32 %v1248, 7
    %v1250 = vsub.s32 0, %v1249
    %v1251 = vrot.slane %v1246, %v1250
    %v1253 = vadd.f32 %v1245, %v1251
    %vm1254 = vcmask 3072
    %1255 = vst.msk [vmem:[%s9] sm:$0xf] %vm1254, %v1253
    // Predicated region
    $region58: #{tpu_custom_call.1} parent=1 // pred_check
      _
    $region59: #{tpu_custom_call.1} parent=1 // pred_check_branch
      %1257 = sbr.rel (0) target = $region61
    $region60: #{tpu_custom_call.1} parent=1 // pred_region
      _
    $region61: #{tpu_custom_call.1} parent=1 // pred_fallthru
      _
    // Predicated region
    $region62: #{tpu_custom_call.1} parent=1 // pred_check
      _
    $region63: #{tpu_custom_call.1} parent=1 // pred_check_branch
      %1259 = sbr.rel (0) target = $region65
    $region64: #{tpu_custom_call.1} parent=1 // pred_region
      _
    $region65: #{tpu_custom_call.1} parent=1 // pred_fallthru
      _
    %1260 = vsyncpa [#allocation4], 1
    %1261 = vsyncpa [#allocation6], 1
    %1262 = vsyncpa [#allocation9], 1

</llo_original>
